<compile_context>
chip_gen: v6e
topology: v6e:2x2x1
jax: 0.10.0
libtpu: 0.0.40
codegen_flags: <defaults>
</compile_context>

<pallas_src>
import functools

import jax
import jax.numpy as jnp
from jax.experimental import pallas as pl
from jax.experimental.pallas import tpu as pltpu


def _round_up(v, m):
    return (v + m - 1) // m * m


@functools.lru_cache(maxsize=None)
def _tpu_generation():
    try:
        kind = jax.devices()[0].device_kind.lower()
    except Exception:
        return 0
    for g in (7, 6, 5, 4):
        if "v%d" % g in kind:
            return g
    return 0


@functools.lru_cache(maxsize=None)
def _vmem_capacity_bytes():
    try:
        return int(pltpu.get_tpu_info().vmem_capacity_bytes)
    except Exception:
        return (64 if _tpu_generation() >= 7 else 128) * 1024 * 1024


def _vmem_limit_bytes():
    # ~48 MiB on v7x (64 MiB VMEM/TC), ~96 MiB on v5e/v6e (128 MiB VMEM).
    return int(min(100 * 1024 * 1024, (_vmem_capacity_bytes() * 3) // 4))


def _act_dtype():
    # v6e/v7x have a bf16 VPU: run the epilogue (bias + LeakyReLU + pre-cast)
    # in bf16 there.  v5e (and unknown chips) keep the f32 epilogue.
    return jnp.bfloat16 if _tpu_generation() >= 6 else jnp.float32


@functools.lru_cache(maxsize=None)
def _weight_pipeline_kwargs():
    """BlockSpec kwargs that single-buffer never-refetched constant operands.

    Probed once with a tiny copy kernel: if this Pallas build rejects
    pipeline_mode=pl.Buffered(1) we fall back to default double-buffering
    (correct, just wastes a little VMEM).
    """
    if not hasattr(pl, "Buffered"):
        return {}

    def _probe(x_ref, o_ref):
        o_ref[...] = x_ref[...]

    try:
        out = pl.pallas_call(
            _probe,
            out_shape=jax.ShapeDtypeStruct((8, 128), jnp.float32),
            grid=(1,),
            in_specs=[pl.BlockSpec((8, 128), lambda i: (0, 0),
                                   pipeline_mode=pl.Buffered(1))],
            out_specs=pl.BlockSpec((8, 128), lambda i: (0, 0)),
        )(jnp.zeros((8, 128), jnp.float32))
        jax.block_until_ready(out)
        return {"pipeline_mode": pl.Buffered(1)}
    except Exception:
        return {}


# ---------------------------------------------------------------------------
# Kernels
# ---------------------------------------------------------------------------
def _im2col_kernel(x_ref, w1_ref, b1_ref, w2_ref, b2_ref, out_ref, *, act_dtype):
    # x_ref   : (1, T, Kp)   bf16  im2col rows (K = 9*Cin zero-padded to Kp)
    # w1_ref  : (Kp, Cmp)    bf16  BN-fused 3x3 conv weights
    # b1_ref  : (1, Cmp)     f32   BN-fused bias
    # w2_ref  : (Cmp, Cop)   bf16  1x1 conv weights
    # b2_ref  : (1, Cop)     f32   1x1 conv bias
    # out_ref : (1, T, Cop)  bf16  lane-dense output tile
    h = jnp.dot(x_ref[0], w1_ref[...], preferred_element_type=jnp.float32)
    h = (h + b1_ref[0]).astype(act_dtype)
    h = jnp.where(h > 0, h, 0.1 * h)                     # LeakyReLU(0.1)
    y = jnp.dot(h.astype(jnp.bfloat16), w2_ref[...],
                preferred_element_type=jnp.float32)
    y = y + b2_ref[0]
    out_ref[0] = y.astype(out_ref.dtype)


def _halo_kernel(x_hbm, w1_ref, b1_ref, w2_ref, b2_ref, out_ref, xbuf,
                 *, rows, wp, act_dtype):
    # x_hbm   : (B, (Hp+2)*wp + 8, Cin)       bf16  flat zero-padded NHWC (HBM)
    # w1_ref  : (9, Cin, Cmp)                 bf16  BN-fused 3x3 taps
    # out_ref : (1, rows*wp, Cop)             bf16  (cols W..W+1 are discarded)
    # xbuf    : ((rows+2)*wp + 8, Cin)        bf16  VMEM haloed row tile
    b = pl.program_id(0)
    r = pl.program_id(1)
    n_buf = xbuf.shape[0]
    # Single activation read from HBM per tile (vs 9x for a wrapper im2col slab).
    pltpu.sync_copy(x_hbm.at[b, pl.ds(r * rows * wp, n_buf)], xbuf)

    acc = None
    for ky in range(3):
        for kx in range(3):
            start = ky * wp + kx                         # static offset
            tap = xbuf[start:start + rows * wp, :]       # (rows*wp, Cin)
            p = jnp.dot(tap, w1_ref[ky * 3 + kx],
                        preferred_element_type=jnp.float32)
            acc = p if acc is None else acc + p

    h = (acc + b1_ref[0]).astype(act_dtype)
    h = jnp.where(h > 0, h, 0.1 * h)                     # LeakyReLU(0.1)
    y = jnp.dot(h.astype(jnp.bfloat16), w2_ref[...],
                preferred_element_type=jnp.float32)
    y = y + b2_ref[0]
    out_ref[0] = y.astype(out_ref.dtype)


# ---------------------------------------------------------------------------
# Wrapper
# ---------------------------------------------------------------------------
@functools.partial(jax.jit, static_argnames=("num_classes", "conv_impl"))
def scale_prediction(x_nchw, params, num_classes, conv_impl=None):
    """Forward pass equivalent to the PyTorch ScalePrediction module.

    x_nchw: (B, Cin, H, W) float32
    conv_impl: None (auto), "im2col" (wrapper slab, small Cin) or
               "halo" (in-kernel im2col from haloed row tiles, Cin >= 64).
    returns: (B, 3, H, W, num_classes + 5) float32
    """
    w1, gamma, beta, rmean, rvar, w2, b2 = params
    B, Cin, H, W = x_nchw.shape
    Cmid = 2 * Cin
    Cout = 3 * (num_classes + 5)
    HW = H * W

    if conv_impl is None:
        conv_impl = "halo" if Cin >= 64 else "im2col"

    Cmp = _round_up(Cmid, 128)   # lane-dense hidden dim
    Cop = _round_up(Cout, 128)   # lane-dense output dim (unmasked stores)
    act_dtype = _act_dtype()
    vmem_limit = _vmem_limit_bytes()
    weight_kw = _weight_pipeline_kwargs()

    # Fuse eval-mode BN into conv1: y = conv(x)*s + (beta - mean*s), s = g/sqrt(v+eps)
    eps = 1e-5
    scale = gamma / jnp.sqrt(rvar + eps)                           # (Cmid,)
    w1_sc = w1 * scale                                             # (3,3,Cin,Cmid)
    b1_p = jnp.pad(beta - rmean * scale, (0, Cmp - Cmid)).reshape(1, Cmp)
    b1_p = b1_p.astype(jnp.float32)
    w2_p = jnp.pad(w2, ((0, Cmp - Cmid), (0, Cop - Cout))).astype(jnp.bfloat16)
    b2_p = jnp.pad(b2, (0, Cop - Cout)).reshape(1, Cop).astype(jnp.float32)

    x_nhwc = jnp.transpose(x_nchw, (0, 2, 3, 1))                   # NCHW -> NHWC

    if conv_impl == "im2col":
        # -------- small-Cin path: wrapper im2col slab, single K-dense matmul --
        K = 9 * Cin
        Kp = _round_up(K, 128)

        cap = 1024 if _vmem_capacity_bytes() <= 64 * 1024 * 1024 else 2048
        T = min(cap, _round_up(HW, 16))
        per_row = 2 * (Kp * 2) + 2 * (Cop * 2) + Cmp * 6 + Cop * 4
        weights_b = (Kp * Cmp + Cmp * Cop) * 2 * (1 if weight_kw else 2)
        while T > 16 and T * per_row + weights_b > (vmem_limit * 3) // 5:
            T = max(16, (T // 2) // 16 * 16)
        while T > 16 and B * pl.cdiv(HW, T) < 2:   # keep both v7x TCs busy
            T = max(16, (T // 2) // 16 * 16)
        HWp = _round_up(HW, T)

        xpad = jnp.pad(x_nhwc, ((0, 0), (1, 1), (1, 1), (0, 0)))
        taps = [xpad[:, ky:ky + H, kx:kx + W, :]
                for ky in range(3) for kx in range(3)]
        im2col = jnp.concatenate(taps, axis=-1).reshape(B, HW, K)
        im2col = jnp.pad(im2col, ((0, 0), (0, HWp - HW), (0, Kp - K)))
        im2col = im2col.astype(jnp.bfloat16)

        w1_mat = jnp.pad(w1_sc.reshape(K, Cmid),
                         ((0, Kp - K), (0, Cmp - Cmid))).astype(jnp.bfloat16)

        flops = 2 * B * HWp * (Kp * Cmp + Cmp * Cop)
        bytes_accessed = (B * HWp * Kp * 2 + (Kp * Cmp + Cmp * Cop) * 2
                          + 4 * (Cmp + Cop) + B * HWp * Cop * 2)

        out = pl.pallas_call(
            functools.partial(_im2col_kernel, act_dtype=act_dtype),
            out_shape=jax.ShapeDtypeStruct((B, HWp, Cop), jnp.bfloat16),
            grid_spec=pltpu.PrefetchScalarGridSpec(
                num_scalar_prefetch=0,
                grid=(B, HWp // T),
                in_specs=[
                    pl.BlockSpec((1, T, Kp), lambda b, s: (b, s, 0)),
                    pl.BlockSpec((Kp, Cmp), lambda b, s: (0, 0), **weight_kw),
                    pl.BlockSpec((1, Cmp), lambda b, s: (0, 0), **weight_kw),
                    pl.BlockSpec((Cmp, Cop), lambda b, s: (0, 0), **weight_kw),
                    pl.BlockSpec((1, Cop), lambda b, s: (0, 0), **weight_kw),
                ],
                out_specs=pl.BlockSpec((1, T, Cop), lambda b, s: (b, s, 0)),
            ),
            compiler_params=pltpu.CompilerParams(
                dimension_semantics=("parallel", "parallel"),
                vmem_limit_bytes=vmem_limit),
            cost_estimate=pl.CostEstimate(
                flops=flops, transcendentals=0, bytes_accessed=bytes_accessed),
        )(im2col, w1_mat, b1_p, w2_p, b2_p)

        out_hw = out[:, :HW, :Cout].reshape(B, H, W, Cout)

    else:
        # -------- large-Cin path: in-kernel im2col from haloed row tiles ------
        wp = W + 2                                   # padded width (1 zero each side)
        target_rows = max(8, (1024 // wp) // 8 * 8)  # ~1K flattened rows per tile
        rows = max(8, min(_round_up(H, 8), target_rows))
        per_row_tile = wp * (Cin * 2 + Cmp * 6 + Cop * 4 + 2 * Cop * 2)
        weights_b = (9 * Cin * Cmp + Cmp * Cop) * 2 * (1 if weight_kw else 2)
        while rows > 8 and rows * per_row_tile + weights_b > (vmem_limit * 3) // 5:
            rows = max(8, (rows // 2) // 8 * 8)
        while rows > 8 and B * pl.cdiv(H, rows) < 2:  # keep both v7x TCs busy
            rows = max(8, (rows // 2) // 8 * 8)
        n_rt = pl.cdiv(H, rows)
        Hp = n_rt * rows

        # Zero-padded NHWC rows flattened to (B, (Hp+2)*wp + 8, Cin); each grid
        # step DMAs one haloed row tile of it straight into VMEM.
        xpad = jnp.pad(x_nhwc, ((0, 0), (1, 1 + Hp - H), (1, 1), (0, 0)))
        x_flat = xpad.reshape(B, (Hp + 2) * wp, Cin)
        x_flat = jnp.pad(x_flat, ((0, 0), (0, 8), (0, 0))).astype(jnp.bfloat16)

        w1_taps = jnp.pad(w1_sc.reshape(9, Cin, Cmid),
                          ((0, 0), (0, 0), (0, Cmp - Cmid))).astype(jnp.bfloat16)

        Trows = rows * wp
        HWo = Hp * wp
        flops = 2 * B * HWo * (9 * Cin * Cmp + Cmp * Cop)
        bytes_accessed = (B * (Hp + 2) * wp * Cin * 2
                          + (9 * Cin * Cmp + Cmp * Cop) * 2
                          + 4 * (Cmp + Cop) + B * HWo * Cop * 2)

        out = pl.pallas_call(
            functools.partial(_halo_kernel, rows=rows, wp=wp,
                              act_dtype=act_dtype),
            out_shape=jax.ShapeDtypeStruct((B, HWo, Cop), jnp.bfloat16),
            grid_spec=pltpu.PrefetchScalarGridSpec(
                num_scalar_prefetch=0,
                grid=(B, n_rt),
                in_specs=[
                    pl.BlockSpec(memory_space=pl.ANY),   # raw HBM, manual DMA
                    pl.BlockSpec((9, Cin, Cmp), lambda b, r: (0, 0, 0), **weight_kw),
                    pl.BlockSpec((1, Cmp), lambda b, r: (0, 0), **weight_kw),
                    pl.BlockSpec((Cmp, Cop), lambda b, r: (0, 0), **weight_kw),
                    pl.BlockSpec((1, Cop), lambda b, r: (0, 0), **weight_kw),
                ],
                out_specs=pl.BlockSpec((1, Trows, Cop), lambda b, r: (b, r, 0)),
                scratch_shapes=[
                    pltpu.VMEM(((rows + 2) * wp + 8, Cin), jnp.bfloat16)],
            ),
            compiler_params=pltpu.CompilerParams(
                dimension_semantics=("parallel", "parallel"),
                vmem_limit_bytes=vmem_limit),
            cost_estimate=pl.CostEstimate(
                flops=flops, transcendentals=0, bytes_accessed=bytes_accessed),
        )(x_flat, w1_taps, b1_p, w2_p, b2_p)

        out_hw = out.reshape(B, Hp, wp, Cop)[:, :H, :W, :Cout]

    # Match PyTorch: reshape(B, 3, nc+5, H, W).permute(0, 1, 3, 4, 2)
    out5 = out_hw.astype(jnp.float32).reshape(B, H, W, 3, num_classes + 5)
    return jnp.transpose(out5, (0, 3, 1, 2, 4))


# ---------------------------------------------------------------------------
# Pure-JAX f32 reference (lax conv) for correctness checking.
# ---------------------------------------------------------------------------
def _reference(x_nchw, params, num_classes):
    w1, gamma, beta, rmean, rvar, w2, b2 = params
    B, Cin, H, W = x_nchw.shape
    eps = 1e-5
    y = jax.lax.conv_general_dilated(
        x_nchw, w1, window_strides=(1, 1), padding=((1, 1), (1, 1)),
        dimension_numbers=("NCHW", "HWIO", "NCHW"))
    scale = gamma / jnp.sqrt(rvar + eps)
    y = y * scale[None, :, None, None] + (beta - rmean * scale)[None, :, None, None]
    y = jnp.where(y > 0, y, 0.1 * y)
    z = jax.lax.conv_general_dilated(
        y, w2[None, None, :, :], window_strides=(1, 1), padding="VALID",
        dimension_numbers=("NCHW", "HWIO", "NCHW"))
    z = z + b2[None, :, None, None]
    z = z.reshape(B, 3, num_classes + 5, H, W)
    return jnp.transpose(z, (0, 1, 3, 4, 2))


if __name__ == "__main__":
    B, Cin, H, W = 2, 4, 16, 16
    num_classes = 3
    Cmid = 2 * Cin
    Cout = 3 * (num_classes + 5)

    key = jax.random.PRNGKey(0)
    ks = jax.random.split(key, 8)
    x = jax.random.normal(ks[0], (B, Cin, H, W), jnp.float32)

    # Deterministic synthetic parameters (HWIO conv weights).
    w1 = 0.1 * jax.random.normal(ks[1], (3, 3, Cin, Cmid), jnp.float32)
    gamma = 1.0 + 0.1 * jax.random.normal(ks[2], (Cmid,), jnp.float32)
    beta = 0.1 * jax.random.normal(ks[3], (Cmid,), jnp.float32)
    rmean = 0.05 * jax.random.normal(ks[4], (Cmid,), jnp.float32)
    rvar = 1.0 + 0.1 * jnp.abs(jax.random.normal(ks[5], (Cmid,), jnp.float32))
    w2 = 0.1 * jax.random.normal(ks[6], (Cmid, Cout), jnp.float32)
    b2 = 0.1 * jax.random.normal(ks[7], (Cout,), jnp.float32)
    params = (w1, gamma, beta, rmean, rvar, w2, b2)

    ref = jax.block_until_ready(_reference(x, params, num_classes))

    # Validate both code paths (auto-dispatch would pick "im2col" at Cin=4;
    # the "halo" path is the one used for real YOLO channel counts).
    for impl in ("im2col", "halo"):
        out = jax.block_until_ready(
            scale_prediction(x, params, num_classes, conv_impl=impl))
        assert out.shape == (B, 3, H, W, num_classes + 5), (impl, out.shape)
        max_err = float(jnp.max(jnp.abs(out - ref)))
        # bf16 MXU operands + bf16 output storage (f32 accumulation throughout).
        assert jnp.allclose(out, ref, atol=4e-2, rtol=4e-2), (impl, max_err)

    print("KERNEL_OK")
</pallas_src>

<mosaic_0001>
module attributes {stable_mosaic.version = 11 : i64} {
  func.func @_im2col_kernel(%arg0: i32, %arg1: i32, %arg2: memref<1x256x128xbf16, #tpu.memory_space<vmem>>, %arg3: memref<128x128xbf16, #tpu.memory_space<vmem>>, %arg4: memref<1x128xf32, #tpu.memory_space<vmem>>, %arg5: memref<128x128xbf16, #tpu.memory_space<vmem>>, %arg6: memref<1x128xf32, #tpu.memory_space<vmem>>, %arg7: memref<1x256x128xbf16, #tpu.memory_space<vmem>>) attributes {dimension_semantics = [#tpu.dimension_semantics<parallel>, #tpu.dimension_semantics<parallel>], iteration_bounds = array<i64: 2, 1>, scalar_prefetch = 0 : i64, scratch_operands = 0 : i64, tpu.core_type = #tpu.core_type<tc>, window_params = [{transform_indices = @transform_0, window_bounds = array<i64: 1, 256, 128>}, {pipeline_mode = #tpu.pipeline_mode<synchronous>, transform_indices = @transform_1, window_bounds = array<i64: 128, 128>}, {pipeline_mode = #tpu.pipeline_mode<synchronous>, transform_indices = @transform_2, window_bounds = array<i64: 1, 128>}, {pipeline_mode = #tpu.pipeline_mode<synchronous>, transform_indices = @transform_3, window_bounds = array<i64: 128, 128>}, {pipeline_mode = #tpu.pipeline_mode<synchronous>, transform_indices = @transform_4, window_bounds = array<i64: 1, 128>}, {transform_indices = @transform_5, window_bounds = array<i64: 1, 256, 128>}]} {
    %c0 = arith.constant 0 : index
    %c0_0 = arith.constant 0 : index
    %c0_1 = arith.constant 0 : index
    %0 = vector.load %arg2[%c0, %c0_0, %c0_1] : memref<1x256x128xbf16, #tpu.memory_space<vmem>>, vector<1x256x128xbf16>
    %1 = vector.shape_cast %0 : vector<1x256x128xbf16> to vector<256x128xbf16>
    %c0_2 = arith.constant 0 : index
    %c0_3 = arith.constant 0 : index
    %2 = vector.load %arg3[%c0_2, %c0_3] : memref<128x128xbf16, #tpu.memory_space<vmem>>, vector<128x128xbf16>
    %cst = arith.constant dense<0.000000e+00> : vector<256x128xf32>
    %3 = tpu.matmul %1, %2, %cst {dimension_numbers = #tpu.dot_dimension_numbers<[1], [0], [0], [1], [0, 0, 1, 1], [], []>} : vector<256x128xbf16>, vector<128x128xbf16>, vector<256x128xf32> -> vector<256x128xf32>
    %c0_4 = arith.constant 0 : index
    %c0_5 = arith.constant 0 : index
    %4 = vector.load %arg4[%c0_4, %c0_5] : memref<1x128xf32, #tpu.memory_space<vmem>>, vector<1x128xf32>
    %5 = vector.shape_cast %4 : vector<1x128xf32> to vector<128xf32>
    %6 = vector.shape_cast %5 : vector<128xf32> to vector<1x128xf32>
    %7 = vector.broadcast %6 : vector<1x128xf32> to vector<256x128xf32>
    %8 = arith.addf %3, %7 : vector<256x128xf32>
    %cst_6 = arith.constant 0.000000e+00 : f32
    %9 = vector.broadcast %cst_6 : f32 to vector<256x128xf32>
    %10 = arith.cmpf ogt, %8, %9 : vector<256x128xf32>
    %cst_7 = arith.constant 1.000000e-01 : f32
    %11 = vector.broadcast %cst_7 : f32 to vector<256x128xf32>
    %12 = arith.mulf %11, %8 : vector<256x128xf32>
    %13 = arith.select %10, %8, %12 : vector<256x128xi1>, vector<256x128xf32>
    %14 = arith.truncf %13 : vector<256x128xf32> to vector<256x128xbf16>
    %c0_8 = arith.constant 0 : index
    %c0_9 = arith.constant 0 : index
    %15 = vector.load %arg5[%c0_8, %c0_9] : memref<128x128xbf16, #tpu.memory_space<vmem>>, vector<128x128xbf16>
    %cst_10 = arith.constant dense<0.000000e+00> : vector<256x128xf32>
    %16 = tpu.matmul %14, %15, %cst_10 {dimension_numbers = #tpu.dot_dimension_numbers<[1], [0], [0], [1], [0, 0, 1, 1], [], []>} : vector<256x128xbf16>, vector<128x128xbf16>, vector<256x128xf32> -> vector<256x128xf32>
    %c0_11 = arith.constant 0 : index
    %c0_12 = arith.constant 0 : index
    %17 = vector.load %arg6[%c0_11, %c0_12] : memref<1x128xf32, #tpu.memory_space<vmem>>, vector<1x128xf32>
    %18 = vector.shape_cast %17 : vector<1x128xf32> to vector<128xf32>
    %19 = vector.shape_cast %18 : vector<128xf32> to vector<1x128xf32>
    %20 = vector.broadcast %19 : vector<1x128xf32> to vector<256x128xf32>
    %21 = arith.addf %16, %20 : vector<256x128xf32>
    %22 = arith.truncf %21 : vector<256x128xf32> to vector<256x128xbf16>
    %c0_13 = arith.constant 0 : index
    %c0_14 = arith.constant 0 : index
    %c0_15 = arith.constant 0 : index
    %23 = vector.load %arg7[%c0_13, %c0_14, %c0_15] : memref<1x256x128xbf16, #tpu.memory_space<vmem>>, vector<1x256x128xbf16>
    %24 = vector.shape_cast %23 : vector<1x256x128xbf16> to vector<256x128xbf16>
    %25 = vector.shape_cast %22 : vector<256x128xbf16> to vector<1x256x128xbf16>
    tpu.vector_store %arg7[%c0_13, %c0_14, %c0_15], %25 {strides = array<i32>} : memref<1x256x128xbf16, #tpu.memory_space<vmem>>, vector<1x256x128xbf16>,
    return
  }
  func.func @transform_0(%arg0: i32, %arg1: i32) -> (i32, i32, i32) {
    %c0_i32 = arith.constant 0 : i32
    %c0_i32_0 = arith.constant 0 : i32
    return %arg0, %arg1, %c0_i32 : i32, i32, i32
  }
  func.func @transform_1(%arg0: i32, %arg1: i32) -> (i32, i32) {
    %c0_i32 = arith.constant 0 : i32
    %c0_i32_0 = arith.constant 0 : i32
    %c0_i32_1 = arith.constant 0 : i32
    return %c0_i32, %c0_i32_0 : i32, i32
  }
  func.func @transform_2(%arg0: i32, %arg1: i32) -> (i32, i32) {
    %c0_i32 = arith.constant 0 : i32
    %c0_i32_0 = arith.constant 0 : i32
    %c0_i32_1 = arith.constant 0 : i32
    return %c0_i32, %c0_i32_0 : i32, i32
  }
  func.func @transform_3(%arg0: i32, %arg1: i32) -> (i32, i32) {
    %c0_i32 = arith.constant 0 : i32
    %c0_i32_0 = arith.constant 0 : i32
    %c0_i32_1 = arith.constant 0 : i32
    return %c0_i32, %c0_i32_0 : i32, i32
  }
  func.func @transform_4(%arg0: i32, %arg1: i32) -> (i32, i32) {
    %c0_i32 = arith.constant 0 : i32
    %c0_i32_0 = arith.constant 0 : i32
    %c0_i32_1 = arith.constant 0 : i32
    return %c0_i32, %c0_i32_0 : i32, i32
  }
  func.func @transform_5(%arg0: i32, %arg1: i32) -> (i32, i32, i32) {
    %c0_i32 = arith.constant 0 : i32
    %c0_i32_0 = arith.constant 0 : i32
    return %arg0, %arg1, %c0_i32 : i32, i32, i32
  }
}

</mosaic_0001>

<llo_original>
// kernel: scale_prediction.1
$region0: #{scale_prediction.1}
  #allocation0 [shape = 'u32[]', space=smem, size = 0x4, offset = 0x4, fixed_abs, tag = 'smem constant byte address 0x4 - core index']
  #allocation1 [shape = 'u32[144,128]{1,0:T(1,128)}', space=vmem, size = 0x12000, scoped, tag = 'internal scratch']
  %s0 = inlined_call_operand.vmem [shape: bf16[2,256,128], index: 0, kind: input, shape index: {}]
  %s1 = inlined_call_operand.vmem [shape: bf16[128,128], index: 1, kind: input, shape index: {}]
  %s2 = inlined_call_operand.vmem [shape: f32[1,128], index: 2, kind: input, shape index: {}]
  %s3 = inlined_call_operand.vmem [shape: bf16[128,128], index: 3, kind: input, shape index: {}]
  %s4 = inlined_call_operand.vmem [shape: f32[1,128], index: 4, kind: input, shape index: {}]
  %s5 = inlined_call_operand.vmem [shape: bf16[2,256,128], index: 5, kind: output, shape index: {}]
  %s6 = sld [smem:[#allocation0]]
  $region53: #{scale_prediction.1} parent=0
    _
  %s8 = ssub.s32 1, %s6
  %s9 = scalar_select 0, %s8, %s6
  loop: start=0, step=1, limit=4
  $region2: #{scale_prediction.1} parent=0 // loop_pre_header
    _
  $region3: #{scale_prediction.1} parent=0 // loop_header
    %s11 = sphi 0, %s15
    %p12 = scmp.ge.s32.totalorder %s11, 4
    %s18 = sphi 0, %s30
    %s19 = sphi 0, %s26
    %s20 = sphi 0, %s18
    %s21 = sphi 0, %s19
    %s22 = sphi 0, %s20
    %s23 = sphi 0, %s21
    %s35 = sphi 0, %s37
    %s38 = sphi 0, %s35
    %s39 = sphi 0, %s38
    %s55 = sphi 0, %s39
    %s59 = sphi 0, %s59
    %s61 = sphi 0, %s59
    %s62 = sphi 0, %s61
    %s76 = sphi 0, %s62
    %s80 = sphi 0, %s80
    %s82 = sphi 0, %s80
    %s83 = sphi 0, %s82
    %s97 = sphi 0, %s83
    %s101 = sphi 0, %s101
    %s103 = sphi 0, %s101
    %s104 = sphi 0, %s103
    %s118 = sphi 0, %s104
    %s122 = sphi 0, %s122
    %s124 = sphi 0, %s122
    %s125 = sphi 0, %s124
    %s139 = sphi 0, %s125
    %s147 = sphi 0, %s149
    %s150 = sphi 0, %s147
    %s151 = sphi 0, %s150
    %s167 = sphi 0, %s151
  $region4: #{scale_prediction.1} parent=0 // loop_header_branch
    %14 = sbr.rel (%p12) target = $region8
  $region5: #{scale_prediction.1} parent=0 // loop_body
    %s16 = ssub.s32 %s11, 1
    %s17 = ssub.s32 %s11, 2
    %s24 = sadd.s32 1, %s19
    %p25 = scmp.ge.s32.totalorder %s24, 1
    %s26 = scalar_select %p25, 0, %s24
    %s27 = sadd.s32 1, %s18
    %s28 = scalar_select %p25, %s27, %s18
    %p29 = scmp.ge.s32.totalorder %s28, 2
    %s30 = scalar_select %p29, 0, %s28
    %s31 = ssub.s32 %s18, %s30
    %s32 = ssub.s32 %s19, %s26
    %s33 = sor.u32 %s31, %s32
    %p34 = scmp.eq.s32.totalorder %s33, 0
    %s36 = sadd.s32 %s35, 1
    %s37 = scalar_select %p34, %s35, %s36
    %p40 = pneg %p34
    %p41 = scmp.eq.s32.totalorder %s11, 1
    %p42 = por %p40, %p41
    %p43 = scmp.ne.s32.totalorder %s35, %s38
    %p44 = scmp.eq.s32.totalorder %s11, 0
    %p45 = por %p43, %p44
    %p46 = scmp.ne.s32.totalorder %s35, %s38
    %p47 = scmp.eq.s32.totalorder %s16, 1
    %p48 = por %p46, %p47
    %p49 = scmp.ne.s32.totalorder %s38, %s39
    %p50 = scmp.eq.s32.totalorder %s16, 0
    %p51 = por %p49, %p50
    %p52 = scmp.ne.s32.totalorder %s38, %s39
    %p53 = scmp.eq.s32.totalorder %s17, 1
    %p54 = por %p52, %p53
    %p56 = scmp.ne.s32.totalorder %s39, %s55
    %p57 = scmp.eq.s32.totalorder %s17, 0
    %p58 = por %p56, %p57
    %s60 = sadd.s32 %s59, 1
    %p63 = scmp.eq.s32.totalorder %s11, 1
    %p64 = scmp.ne.s32.totalorder %s59, %s61
    %p65 = scmp.eq.s32.totalorder %s11, 0
    %p66 = por %p64, %p65
    %p67 = scmp.ne.s32.totalorder %s59, %s61
    %p68 = scmp.eq.s32.totalorder %s16, 1
    %p69 = por %p67, %p68
    %p70 = scmp.ne.s32.totalorder %s61, %s62
    %p71 = scmp.eq.s32.totalorder %s16, 0
    %p72 = por %p70, %p71
    %p73 = scmp.ne.s32.totalorder %s61, %s62
    %p74 = scmp.eq.s32.totalorder %s17, 1
    %p75 = por %p73, %p74
    %p77 = scmp.ne.s32.totalorder %s62, %s76
    %p78 = scmp.eq.s32.totalorder %s17, 0
    %p79 = por %p77, %p78
    %s81 = sadd.s32 %s80, 1
    %p84 = scmp.eq.s32.totalorder %s11, 1
    %p85 = scmp.ne.s32.totalorder %s80, %s82
    %p86 = scmp.eq.s32.totalorder %s11, 0
    %p87 = por %p85, %p86
    %p88 = scmp.ne.s32.totalorder %s80, %s82
    %p89 = scmp.eq.s32.totalorder %s16, 1
    %p90 = por %p88, %p89
    %p91 = scmp.ne.s32.totalorder %s82, %s83
    %p92 = scmp.eq.s32.totalorder %s16, 0
    %p93 = por %p91, %p92
    %p94 = scmp.ne.s32.totalorder %s82, %s83
    %p95 = scmp.eq.s32.totalorder %s17, 1
    %p96 = por %p94, %p95
    %p98 = scmp.ne.s32.totalorder %s83, %s97
    %p99 = scmp.eq.s32.totalorder %s17, 0
    %p100 = por %p98, %p99
    %s102 = sadd.s32 %s101, 1
    %p105 = scmp.eq.s32.totalorder %s11, 1
    %p106 = scmp.ne.s32.totalorder %s101, %s103
    %p107 = scmp.eq.s32.totalorder %s11, 0
    %p108 = por %p106, %p107
    %p109 = scmp.ne.s32.totalorder %s101, %s103
    %p110 = scmp.eq.s32.totalorder %s16, 1
    %p111 = por %p109, %p110
    %p112 = scmp.ne.s32.totalorder %s103, %s104
    %p113 = scmp.eq.s32.totalorder %s16, 0
    %p114 = por %p112, %p113
    %p115 = scmp.ne.s32.totalorder %s103, %s104
    %p116 = scmp.eq.s32.totalorder %s17, 1
    %p117 = por %p115, %p116
    %p119 = scmp.ne.s32.totalorder %s104, %s118
    %p120 = scmp.eq.s32.totalorder %s17, 0
    %p121 = por %p119, %p120
    %s123 = sadd.s32 %s122, 1
    %p126 = scmp.eq.s32.totalorder %s11, 1
    %p127 = scmp.ne.s32.totalorder %s122, %s124
    %p128 = scmp.eq.s32.totalorder %s11, 0
    %p129 = por %p127, %p128
    %p130 = scmp.ne.s32.totalorder %s122, %s124
    %p131 = scmp.eq.s32.totalorder %s16, 1
    %p132 = por %p130, %p131
    %p133 = scmp.ne.s32.totalorder %s124, %s125
    %p134 = scmp.eq.s32.totalorder %s16, 0
    %p135 = por %p133, %p134
    %p136 = scmp.ne.s32.totalorder %s124, %s125
    %p137 = scmp.eq.s32.totalorder %s17, 1
    %p138 = por %p136, %p137
    %p140 = scmp.ne.s32.totalorder %s125, %s139
    %p141 = scmp.eq.s32.totalorder %s17, 0
    %p142 = por %p140, %p141
    %s143 = ssub.s32 %s18, %s30
    %s144 = ssub.s32 %s19, %s26
    %s145 = sor.u32 %s143, %s144
    %p146 = scmp.eq.s32.totalorder %s145, 0
    %s148 = sadd.s32 %s147, 1
    %s149 = scalar_select %p146, %s147, %s148
    %p152 = pneg %p146
    %p153 = scmp.eq.s32.totalorder %s11, 1
    %p154 = por %p152, %p153
    %p155 = scmp.ne.s32.totalorder %s147, %s150
    %p156 = scmp.eq.s32.totalorder %s11, 0
    %p157 = por %p155, %p156
    %p158 = scmp.ne.s32.totalorder %s147, %s150
    %p159 = scmp.eq.s32.totalorder %s16, 1
    %p160 = por %p158, %p159
    %p161 = scmp.ne.s32.totalorder %s150, %s151
    %p162 = scmp.eq.s32.totalorder %s16, 0
    %p163 = por %p161, %p162
    %p164 = scmp.ne.s32.totalorder %s150, %s151
    %p165 = scmp.eq.s32.totalorder %s17, 1
    %p166 = por %p164, %p165
    %p168 = scmp.ne.s32.totalorder %s151, %s167
    %p169 = scmp.eq.s32.totalorder %s17, 0
    %p170 = por %p168, %p169
    %p171 = scmp.le.s32.totalorder 1, %s11
    %p172 = scmp.lt.s32.totalorder %s11, 3
    %p173 = pnand %p171, %p172
    %p174 = pneg %p173
    // Predicated region
    $region9: #{scale_prediction.1} parent=5 // pred_check
      _
    $region10: #{scale_prediction.1} parent=5 // pred_check_branch
      %176 = sbr.rel (%p173) target = $region12
    $region11: #{scale_prediction.1} parent=5 // pred_region
      %s177 = ssub.s32 %s11, 1
      // Predicated region
      $region13: #{scale_prediction.1} parent=11 // pred_check
        %p178 = pneg %p72
      $region14: #{scale_prediction.1} parent=11 // pred_check_branch
        %180 = sbr.rel (%p178) target = $region16
      $region15: #{scale_prediction.1} parent=11 // pred_region
        _
      $region16: #{scale_prediction.1} parent=11 // pred_fallthru
        _
      // Predicated region
      $region17: #{scale_prediction.1} parent=11 // pred_check
        %p181 = pneg %p93
      $region18: #{scale_prediction.1} parent=11 // pred_check_branch
        %183 = sbr.rel (%p181) target = $region20
      $region19: #{scale_prediction.1} parent=11 // pred_region
        _
      $region20: #{scale_prediction.1} parent=11 // pred_fallthru
        _
      // Predicated region
      $region21: #{scale_prediction.1} parent=11 // pred_check
        %p184 = pneg %p114
      $region22: #{scale_prediction.1} parent=11 // pred_check_branch
        %186 = sbr.rel (%p184) target = $region24
      $region23: #{scale_prediction.1} parent=11 // pred_region
        _
      $region24: #{scale_prediction.1} parent=11 // pred_fallthru
        _
      // Predicated region
      $region25: #{scale_prediction.1} parent=11 // pred_check
        %p187 = pneg %p135
      $region26: #{scale_prediction.1} parent=11 // pred_check_branch
        %189 = sbr.rel (%p187) target = $region28
      $region27: #{scale_prediction.1} parent=11 // pred_region
        _
      $region28: #{scale_prediction.1} parent=11 // pred_fallthru
        _
    $region12: #{scale_prediction.1} parent=5 // pred_fallthru
      _
    %p190 = scmp.lt.s32.totalorder %s11, 2
    // Predicated region
    $region29: #{scale_prediction.1} parent=5 // pred_check
      %p191 = pneg %p190
    $region30: #{scale_prediction.1} parent=5 // pred_check_branch
      %193 = sbr.rel (%p191) target = $region32
    $region31: #{scale_prediction.1} parent=5 // pred_region
      // Predicated region
      $region33: #{scale_prediction.1} parent=31 // pred_check
        %p194 = pneg %p45
      $region34: #{scale_prediction.1} parent=31 // pred_check_branch
        %196 = sbr.rel (%p194) target = $region36
      $region35: #{scale_prediction.1} parent=31 // pred_region
        %s197 = smul.u32 32, %s19
        %p198 = scmp.lt.s32.totalorder %s18, 1
        %s199 = scalar_select %p198, %s18, 1
        %p200 = scmp.lt.s32.totalorder %s197, 31
        %s201 = scalar_select %p200, %s197, 31
        %s202 = smul.addr %s199, 32
        %s203 = sadd.s32 %s201, %s202
        %s204 = smul.addr %s203, 4
        %s205 = scalar_lea.vmem %s0, %s204
        %s206 = smul.u32 32, %s19
      $region36: #{scale_prediction.1} parent=31 // pred_fallthru
        _
    $region32: #{scale_prediction.1} parent=5 // pred_fallthru
      _
    %p207 = scmp.le.s32.totalorder 1, %s11
    %p208 = scmp.lt.s32.totalorder %s11, 3
    %p209 = pnand %p207, %p208
    %p210 = pneg %p209
    // Predicated region
    $region37: #{scale_prediction.1} parent=5 // pred_check
      _
    $region38: #{scale_prediction.1} parent=5 // pred_check_branch
      %212 = sbr.rel (%p209) target = $region40
    $region39: #{scale_prediction.1} parent=5 // pred_region
      %s213 = ssub.s32 %s11, 1
      %s214 = smul.u32 32, %s21
      %p215 = scmp.lt.s32.totalorder %s20, 1
      %s216 = scalar_select %p215, %s20, 1
      %p217 = scmp.lt.s32.totalorder %s214, 31
      %s218 = scalar_select %p217, %s214, 31
      %s219 = smul.addr %s216, 32
      %s220 = sadd.s32 %s218, %s219
      %s221 = smul.addr %s220, 4
      %s222 = scalar_lea.vmem %s0, %s221
      %p223 = pneg %p51
      %p224 = pneg %p48
      %p225 = pneg %p72
      %p226 = pneg %p69
      %p227 = pneg %p93
      %p228 = pneg %p90
      %p229 = pneg %p114
      %p230 = pneg %p111
      %p231 = pneg %p135
      %p232 = pneg %p132
      %p233 = pneg %p163
      %p234 = pneg %p160
      %s235 = smul.u32 32, %s21
      %p236 = scmp.lt.s32.totalorder %s20, 1
      %s237 = scalar_select %p236, %s20, 1
      %p238 = scmp.lt.s32.totalorder %s235, 31
      %s239 = scalar_select %p238, %s235, 31
      %s240 = smul.addr %s237, 32
      %s241 = sadd.s32 %s239, %s240
      %s242 = smul.addr %s241, 4
      %s243 = scalar_lea.vmem %s5, %s242
      %s244 = smul.u32 32, %s21
      %p245 = scmp.lt.s32.totalorder %s20, 1
      %s246 = scalar_select %p245, %s20, 1
      %p247 = scmp.lt.s32.totalorder %s244, 31
      %s248 = scalar_select %p247, %s244, 31
      %s249 = smul.addr %s246, 32
      %s250 = sadd.s32 %s248, %s249
      %s251 = smul.addr %s250, 4
      %s252 = scalar_lea.vmem %s0, %s251
      %s253 = smul.u32 32, %s21
      %s254 = smul.u32 32, %s21
      %p255 = scmp.lt.s32.totalorder %s20, 1
      %s256 = scalar_select %p255, %s20, 1
      %p257 = scmp.lt.s32.totalorder %s254, 31
      %s258 = scalar_select %p257, %s254, 31
      %s259 = smul.addr %s256, 32
      %s260 = sadd.s32 %s258, %s259
      %s261 = smul.addr %s260, 4
      %s262 = scalar_lea.vmem %s5, %s261
      %s263 = smul.u32 32, %s21
      %v265 = vld [vmem:[%s252] sm:$0xf]
      %v266 = vld [vmem:[%s252 + $0x4] sm:$0xf]
      %v267 = vld [vmem:[%s252 + $0x8] sm:$0xf]
      %v268 = vld [vmem:[%s252 + $0xc] sm:$0xf]
      %v269 = vld [vmem:[%s252 + $0x10] sm:$0xf]
      %v270 = vld [vmem:[%s252 + $0x14] sm:$0xf]
      %v271 = vld [vmem:[%s252 + $0x18] sm:$0xf]
      %v272 = vld [vmem:[%s252 + $0x1c] sm:$0xf]
      %v273 = vld [vmem:[%s252 + $0x20] sm:$0xf]
      %v274 = vld [vmem:[%s252 + $0x24] sm:$0xf]
      %v275 = vld [vmem:[%s252 + $0x28] sm:$0xf]
      %v276 = vld [vmem:[%s252 + $0x2c] sm:$0xf]
      %v277 = vld [vmem:[%s252 + $0x30] sm:$0xf]
      %v278 = vld [vmem:[%s252 + $0x34] sm:$0xf]
      %v279 = vld [vmem:[%s252 + $0x38] sm:$0xf]
      %v280 = vld [vmem:[%s252 + $0x3c] sm:$0xf]
      %v281 = vld [vmem:[%s252 + $0x40] sm:$0xf]
      %v282 = vld [vmem:[%s252 + $0x44] sm:$0xf]
      %v283 = vld [vmem:[%s252 + $0x48] sm:$0xf]
      %v284 = vld [vmem:[%s252 + $0x4c] sm:$0xf]
      %v285 = vld [vmem:[%s252 + $0x50] sm:$0xf]
      %v286 = vld [vmem:[%s252 + $0x54] sm:$0xf]
      %v287 = vld [vmem:[%s252 + $0x58] sm:$0xf]
      %v288 = vld [vmem:[%s252 + $0x5c] sm:$0xf]
      %v289 = vld [vmem:[%s252 + $0x60] sm:$0xf]
      %v290 = vld [vmem:[%s252 + $0x64] sm:$0xf]
      %v291 = vld [vmem:[%s252 + $0x68] sm:$0xf]
      %v292 = vld [vmem:[%s252 + $0x6c] sm:$0xf]
      %v293 = vld [vmem:[%s252 + $0x70] sm:$0xf]
      %v294 = vld [vmem:[%s252 + $0x74] sm:$0xf]
      %v295 = vld [vmem:[%s252 + $0x78] sm:$0xf]
      %v296 = vld [vmem:[%s252 + $0x7c] sm:$0xf]
      %v297 = vld [vmem:[%s1] sm:$0xf]
      %v298 = vld [vmem:[%s1 + $0x4] sm:$0xf]
      %v299 = vld [vmem:[%s1 + $0x8] sm:$0xf]
      %v300 = vld [vmem:[%s1 + $0xc] sm:$0xf]
      %v301 = vld [vmem:[%s1 + $0x10] sm:$0xf]
      %v302 = vld [vmem:[%s1 + $0x14] sm:$0xf]
      %v303 = vld [vmem:[%s1 + $0x18] sm:$0xf]
      %v304 = vld [vmem:[%s1 + $0x1c] sm:$0xf]
      %v305 = vld [vmem:[%s1 + $0x20] sm:$0xf]
      %v306 = vld [vmem:[%s1 + $0x24] sm:$0xf]
      %v307 = vld [vmem:[%s1 + $0x28] sm:$0xf]
      %v308 = vld [vmem:[%s1 + $0x2c] sm:$0xf]
      %v309 = vld [vmem:[%s1 + $0x30] sm:$0xf]
      %v310 = vld [vmem:[%s1 + $0x34] sm:$0xf]
      %v311 = vld [vmem:[%s1 + $0x38] sm:$0xf]
      %v312 = vld [vmem:[%s1 + $0x3c] sm:$0xf]
      %v313 = vld [vmem:[%s2] sm:$0x1]
      %v315 = vlaneseq
      %v316 = vshrl.u32 %v315, 7
      %v317 = vsub.s32 0, %v316
      %v318 = vrot.slane %v313, %v317
      %v352 = vunpack.c.l.b16 %v265
      %v353 = vunpack.c.l.b16 %v266
      %v354 = vunpack.c.l.b16 %v267
      %v355 = vunpack.c.l.b16 %v268
      %v356 = vunpack.c.l.b16 %v269
      %v357 = vunpack.c.l.b16 %v270
      %v358 = vunpack.c.l.b16 %v271
      %v359 = vunpack.c.l.b16 %v272
      %v360 = vunpack.c.l.b16 %v273
      %v361 = vunpack.c.l.b16 %v274
      %v362 = vunpack.c.l.b16 %v275
      %v363 = vunpack.c.l.b16 %v276
      %v364 = vunpack.c.l.b16 %v277
      %v365 = vunpack.c.l.b16 %v278
      %v366 = vunpack.c.l.b16 %v279
      %v367 = vunpack.c.l.b16 %v280
      %v368 = vunpack.c.l.b16 %v281
      %v369 = vunpack.c.l.b16 %v282
      %v370 = vunpack.c.l.b16 %v283
      %v371 = vunpack.c.l.b16 %v284
      %v372 = vunpack.c.l.b16 %v285
      %v373 = vunpack.c.l.b16 %v286
      %v374 = vunpack.c.l.b16 %v287
      %v375 = vunpack.c.l.b16 %v288
      %v376 = vunpack.c.l.b16 %v289
      %v377 = vunpack.c.l.b16 %v290
      %v378 = vunpack.c.l.b16 %v291
      %v379 = vunpack.c.l.b16 %v292
      %v380 = vunpack.c.l.b16 %v293
      %v381 = vunpack.c.l.b16 %v294
      %v382 = vunpack.c.l.b16 %v295
      %v383 = vunpack.c.l.b16 %v296
      %v384 = vpack.c.b16 %v353, %v352
      %v385 = vpack.c.b16 %v355, %v354
      %v386 = vpack.c.b16 %v357, %v356
      %v387 = vpack.c.b16 %v359, %v358
      %v388 = vpack.c.b16 %v361, %v360
      %v389 = vpack.c.b16 %v363, %v362
      %v390 = vpack.c.b16 %v365, %v364
      %v391 = vpack.c.b16 %v367, %v366
      %v392 = vpack.c.b16 %v369, %v368
      %v393 = vpack.c.b16 %v371, %v370
      %v394 = vpack.c.b16 %v373, %v372
      %v395 = vpack.c.b16 %v375, %v374
      %v396 = vpack.c.b16 %v377, %v376
      %v397 = vpack.c.b16 %v379, %v378
      %v398 = vpack.c.b16 %v381, %v380
      %v399 = vpack.c.b16 %v383, %v382
      %v432 = vunpack.c.l.b16 %v297
      %v433 = vunpack.c.l.b16 %v298
      %v434 = vunpack.c.l.b16 %v299
      %v435 = vunpack.c.l.b16 %v300
      %v436 = vunpack.c.l.b16 %v301
      %v437 = vunpack.c.l.b16 %v302
      %v438 = vunpack.c.l.b16 %v303
      %v439 = vunpack.c.l.b16 %v304
      %v440 = vunpack.c.l.b16 %v305
      %v441 = vunpack.c.l.b16 %v306
      %v442 = vunpack.c.l.b16 %v307
      %v443 = vunpack.c.l.b16 %v308
      %v444 = vunpack.c.l.b16 %v309
      %v445 = vunpack.c.l.b16 %v310
      %v446 = vunpack.c.l.b16 %v311
      %v447 = vunpack.c.l.b16 %v312
      %v448 = vpack.c.b16 %v433, %v432
      %v449 = vpack.c.b16 %v435, %v434
      %v450 = vpack.c.b16 %v437, %v436
      %v451 = vpack.c.b16 %v439, %v438
      %v452 = vpack.c.b16 %v441, %v440
      %v453 = vpack.c.b16 %v443, %v442
      %v454 = vpack.c.b16 %v445, %v444
      %v455 = vpack.c.b16 %v447, %v446
      %464 = vmatprep.subr.bf16.mxu0 0
      %465 = vmatpush1.bf16.msra.mxu0 %v455
      %466 = vmatprep.subr.bf16.mxu0 0
      %467 = vmatpush1.bf16.msra.mxu0 %v454
      %468 = vmatprep.subr.bf16.mxu0 0
      %469 = vmatpush1.bf16.msra.mxu0 %v453
      %470 = vmatprep.subr.bf16.mxu0 0
      %471 = vmatpush1.bf16.msra.mxu0 %v452
      %472 = vmatprep.subr.bf16.mxu0 0
      %473 = vmatpush1.bf16.msra.mxu0 %v451
      %474 = vmatprep.subr.bf16.mxu0 0
      %475 = vmatpush1.bf16.msra.mxu0 %v450
      %476 = vmatprep.subr.bf16.mxu0 0
      %477 = vmatpush1.bf16.msra.mxu0 %v449
      %478 = vmatprep.subr.bf16.mxu0 0
      %479 = vmatpush1.bf16.msra.mxu0 %v448
      %480 = vmatprep.subr.bf16.mxu0 0
      %481 = vmatpush2.bf16.msra.mxu0 0
      %482 = vmatprep.subr.bf16.mxu0 0
      %483 = vmatpush2.bf16.msra.mxu0 0
      %484 = vmatprep.subr.bf16.mxu0 0
      %485 = vmatpush2.bf16.msra.mxu0 0
      %486 = vmatprep.subr.bf16.mxu0 0
      %487 = vmatpush2.bf16.msra.mxu0 0
      %488 = vmatprep.subr.bf16.mxu0 0
      %489 = vmatpush2.bf16.msra.mxu0 0
      %490 = vmatprep.subr.bf16.mxu0 0
      %491 = vmatpush2.bf16.msra.mxu0 0
      %492 = vmatprep.subr.bf16.mxu0 0
      %493 = vmatpush2.bf16.msra.mxu0 0
      %494 = vmatprep.subr.bf16.mxu0 0
      %495 = vmatpush2.bf16.msra.mxu0 0
      %496 = vmatprep.mubr.bf16.mxu0 0
      %497 = vmatmul.mubr.bf16.gmra.mxu0 %v384
      %v498 = vpop.f32.mrf.mxu0
      %v499 = vadd.f32 %v318, %v498
      %v500 = vpop.f32.mrf.mxu0
      %v501 = vpop.f32.mrf.mxu0
      %v502 = vadd.f32 %v318, %v501
      %v503 = vpop.f32.mrf.mxu0
      %504 = vmatprep.mubr.bf16.mxu0 0
      %505 = vmatmul.mubr.bf16.gmra.mxu0 %v385
      %v506 = vpop.f32.mrf.mxu0
      %v507 = vadd.f32 %v318, %v506
      %v508 = vpop.f32.mrf.mxu0
      %v509 = vpop.f32.mrf.mxu0
      %v510 = vadd.f32 %v318, %v509
      %v511 = vpop.f32.mrf.mxu0
      %512 = vmatprep.mubr.bf16.mxu0 0
      %513 = vmatmul.mubr.bf16.gmra.mxu0 %v386
      %v514 = vpop.f32.mrf.mxu0
      %v515 = vadd.f32 %v318, %v514
      %v516 = vpop.f32.mrf.mxu0
      %v517 = vpop.f32.mrf.mxu0
      %v518 = vadd.f32 %v318, %v517
      %v519 = vpop.f32.mrf.mxu0
      %520 = vmatprep.mubr.bf16.mxu0 0
      %521 = vmatmul.mubr.bf16.gmra.mxu0 %v387
      %v522 = vpop.f32.mrf.mxu0
      %v523 = vadd.f32 %v318, %v522
      %v524 = vpop.f32.mrf.mxu0
      %v525 = vpop.f32.mrf.mxu0
      %v526 = vadd.f32 %v318, %v525
      %v527 = vpop.f32.mrf.mxu0
      %528 = vmatprep.mubr.bf16.mxu0 0
      %529 = vmatmul.mubr.bf16.gmra.mxu0 %v388
      %v530 = vpop.f32.mrf.mxu0
      %v531 = vadd.f32 %v318, %v530
      %v532 = vpop.f32.mrf.mxu0
      %v533 = vpop.f32.mrf.mxu0
      %v534 = vadd.f32 %v318, %v533
      %v535 = vpop.f32.mrf.mxu0
      %536 = vmatprep.mubr.bf16.mxu0 0
      %537 = vmatmul.mubr.bf16.gmra.mxu0 %v389
      %v538 = vpop.f32.mrf.mxu0
      %v539 = vadd.f32 %v318, %v538
      %v540 = vpop.f32.mrf.mxu0
      %v541 = vpop.f32.mrf.mxu0
      %v542 = vadd.f32 %v318, %v541
      %v543 = vpop.f32.mrf.mxu0
      %544 = vmatprep.mubr.bf16.mxu0 0
      %545 = vmatmul.mubr.bf16.gmra.mxu0 %v390
      %v546 = vpop.f32.mrf.mxu0
      %v547 = vadd.f32 %v318, %v546
      %v548 = vpop.f32.mrf.mxu0
      %v549 = vpop.f32.mrf.mxu0
      %v550 = vadd.f32 %v318, %v549
      %v551 = vpop.f32.mrf.mxu0
      %552 = vmatprep.mubr.bf16.mxu0 0
      %553 = vmatmul.mubr.bf16.gmra.mxu0 %v391
      %v554 = vpop.f32.mrf.mxu0
      %v555 = vadd.f32 %v318, %v554
      %v556 = vpop.f32.mrf.mxu0
      %v557 = vpop.f32.mrf.mxu0
      %v558 = vadd.f32 %v318, %v557
      %v559 = vpop.f32.mrf.mxu0
      %560 = vmatprep.mubr.bf16.mxu0 0
      %561 = vmatmul.mubr.bf16.gmra.mxu0 %v392
      %v562 = vpop.f32.mrf.mxu0
      %v563 = vadd.f32 %v318, %v562
      %v564 = vpop.f32.mrf.mxu0
      %v565 = vpop.f32.mrf.mxu0
      %v566 = vadd.f32 %v318, %v565
      %v567 = vpop.f32.mrf.mxu0
      %568 = vmatprep.mubr.bf16.mxu0 0
      %569 = vmatmul.mubr.bf16.gmra.mxu0 %v393
      %v570 = vpop.f32.mrf.mxu0
      %v571 = vadd.f32 %v318, %v570
      %v572 = vpop.f32.mrf.mxu0
      %v573 = vpop.f32.mrf.mxu0
      %v574 = vadd.f32 %v318, %v573
      %v575 = vpop.f32.mrf.mxu0
      %576 = vmatprep.mubr.bf16.mxu0 0
      %577 = vmatmul.mubr.bf16.gmra.mxu0 %v394
      %v578 = vpop.f32.mrf.mxu0
      %v579 = vadd.f32 %v318, %v578
      %v580 = vpop.f32.mrf.mxu0
      %v581 = vpop.f32.mrf.mxu0
      %v582 = vadd.f32 %v318, %v581
      %v583 = vpop.f32.mrf.mxu0
      %584 = vmatprep.mubr.bf16.mxu0 0
      %585 = vmatmul.mubr.bf16.gmra.mxu0 %v395
      %v586 = vpop.f32.mrf.mxu0
      %v587 = vadd.f32 %v318, %v586
      %v588 = vpop.f32.mrf.mxu0
      %v589 = vpop.f32.mrf.mxu0
      %v590 = vadd.f32 %v318, %v589
      %v591 = vpop.f32.mrf.mxu0
      %592 = vmatprep.mubr.bf16.mxu0 0
      %593 = vmatmul.mubr.bf16.gmra.mxu0 %v396
      %v594 = vpop.f32.mrf.mxu0
      %v595 = vadd.f32 %v318, %v594
      %v596 = vpop.f32.mrf.mxu0
      %v597 = vpop.f32.mrf.mxu0
      %v598 = vadd.f32 %v318, %v597
      %v599 = vpop.f32.mrf.mxu0
      %600 = vmatprep.mubr.bf16.mxu0 0
      %601 = vmatmul.mubr.bf16.gmra.mxu0 %v397
      %v602 = vpop.f32.mrf.mxu0
      %v603 = vadd.f32 %v318, %v602
      %v604 = vpop.f32.mrf.mxu0
      %v605 = vpop.f32.mrf.mxu0
      %v606 = vadd.f32 %v318, %v605
      %v607 = vpop.f32.mrf.mxu0
      %608 = vmatprep.mubr.bf16.mxu0 0
      %609 = vmatmul.mubr.bf16.gmra.mxu0 %v398
      %v610 = vpop.f32.mrf.mxu0
      %v611 = vadd.f32 %v318, %v610
      %v612 = vpop.f32.mrf.mxu0
      %v613 = vpop.f32.mrf.mxu0
      %v614 = vadd.f32 %v318, %v613
      %v615 = vpop.f32.mrf.mxu0
      %616 = vmatprep.mubr.bf16.mxu0 0
      %617 = vmatmul.mubr.bf16.gmra.mxu0 %v399
      %v618 = vpop.f32.mrf.mxu0
      %v619 = vadd.f32 %v318, %v618
      %v620 = vpop.f32.mrf.mxu0
      %v621 = vpop.f32.mrf.mxu0
      %v622 = vadd.f32 %v318, %v621
      %v623 = vpop.f32.mrf.mxu0
      %624 = vdwg.mxu0
      %vm625 = vcmp.gt.f32.partialorder %v499, 0.0
      %vm626 = vcmp.gt.f32.partialorder %v502, 0.0
      %vm627 = vcmp.gt.f32.partialorder %v507, 0.0
      %vm628 = vcmp.gt.f32.partialorder %v510, 0.0
      %vm629 = vcmp.gt.f32.partialorder %v515, 0.0
      %vm630 = vcmp.gt.f32.partialorder %v518, 0.0
      %vm631 = vcmp.gt.f32.partialorder %v523, 0.0
      %vm632 = vcmp.gt.f32.partialorder %v526, 0.0
      %vm633 = vcmp.gt.f32.partialorder %v531, 0.0
      %vm634 = vcmp.gt.f32.partialorder %v534, 0.0
      %vm635 = vcmp.gt.f32.partialorder %v539, 0.0
      %vm636 = vcmp.gt.f32.partialorder %v542, 0.0
      %vm637 = vcmp.gt.f32.partialorder %v547, 0.0
      %vm638 = vcmp.gt.f32.partialorder %v550, 0.0
      %vm639 = vcmp.gt.f32.partialorder %v555, 0.0
      %vm640 = vcmp.gt.f32.partialorder %v558, 0.0
      %vm641 = vcmp.gt.f32.partialorder %v563, 0.0
      %vm642 = vcmp.gt.f32.partialorder %v566, 0.0
      %vm643 = vcmp.gt.f32.partialorder %v571, 0.0
      %vm644 = vcmp.gt.f32.partialorder %v574, 0.0
      %vm645 = vcmp.gt.f32.partialorder %v579, 0.0
      %vm646 = vcmp.gt.f32.partialorder %v582, 0.0
      %vm647 = vcmp.gt.f32.partialorder %v587, 0.0
      %vm648 = vcmp.gt.f32.partialorder %v590, 0.0
      %vm649 = vcmp.gt.f32.partialorder %v595, 0.0
      %vm650 = vcmp.gt.f32.partialorder %v598, 0.0
      %vm651 = vcmp.gt.f32.partialorder %v603, 0.0
      %vm652 = vcmp.gt.f32.partialorder %v606, 0.0
      %vm653 = vcmp.gt.f32.partialorder %v611, 0.0
      %vm654 = vcmp.gt.f32.partialorder %v614, 0.0
      %vm655 = vcmp.gt.f32.partialorder %v619, 0.0
      %vm656 = vcmp.gt.f32.partialorder %v622, 0.0
      %v657 = vmul.f32 %v499, 0.1
      %v658 = vmul.f32 %v502, 0.1
      %v659 = vmul.f32 %v507, 0.1
      %v660 = vmul.f32 %v510, 0.1
      %v661 = vmul.f32 %v515, 0.1
      %v662 = vmul.f32 %v518, 0.1
      %v663 = vmul.f32 %v523, 0.1
      %v664 = vmul.f32 %v526, 0.1
      %v665 = vmul.f32 %v531, 0.1
      %v666 = vmul.f32 %v534, 0.1
      %v667 = vmul.f32 %v539, 0.1
      %v668 = vmul.f32 %v542, 0.1
      %v669 = vmul.f32 %v547, 0.1
      %v670 = vmul.f32 %v550, 0.1
      %v671 = vmul.f32 %v555, 0.1
      %v672 = vmul.f32 %v558, 0.1
      %v673 = vmul.f32 %v563, 0.1
      %v674 = vmul.f32 %v566, 0.1
      %v675 = vmul.f32 %v571, 0.1
      %v676 = vmul.f32 %v574, 0.1
      %v677 = vmul.f32 %v579, 0.1
      %v678 = vmul.f32 %v582, 0.1
      %v679 = vmul.f32 %v587, 0.1
      %v680 = vmul.f32 %v590, 0.1
      %v681 = vmul.f32 %v595, 0.1
      %v682 = vmul.f32 %v598, 0.1
      %v683 = vmul.f32 %v603, 0.1
      %v684 = vmul.f32 %v606, 0.1
      %v685 = vmul.f32 %v611, 0.1
      %v686 = vmul.f32 %v614, 0.1
      %v687 = vmul.f32 %v619, 0.1
      %v688 = vmul.f32 %v622, 0.1
      %v689 = vsel %vm625, %v499, %v657
      %v690 = vsel %vm626, %v502, %v658
      %v691 = vsel %vm627, %v507, %v659
      %v692 = vsel %vm628, %v510, %v660
      %v693 = vsel %vm629, %v515, %v661
      %v694 = vsel %vm630, %v518, %v662
      %v695 = vsel %vm631, %v523, %v663
      %v696 = vsel %vm632, %v526, %v664
      %v697 = vsel %vm633, %v531, %v665
      %v698 = vsel %vm634, %v534, %v666
      %v699 = vsel %vm635, %v539, %v667
      %v700 = vsel %vm636, %v542, %v668
      %v701 = vsel %vm637, %v547, %v669
      %v702 = vsel %vm638, %v550, %v670
      %v703 = vsel %vm639, %v555, %v671
      %v704 = vsel %vm640, %v558, %v672
      %v705 = vsel %vm641, %v563, %v673
      %v706 = vsel %vm642, %v566, %v674
      %v707 = vsel %vm643, %v571, %v675
      %v708 = vsel %vm644, %v574, %v676
      %v709 = vsel %vm645, %v579, %v677
      %v710 = vsel %vm646, %v582, %v678
      %v711 = vsel %vm647, %v587, %v679
      %v712 = vsel %vm648, %v590, %v680
      %v713 = vsel %vm649, %v595, %v681
      %v714 = vsel %vm650, %v598, %v682
      %v715 = vsel %vm651, %v603, %v683
      %v716 = vsel %vm652, %v606, %v684
      %v717 = vsel %vm653, %v611, %v685
      %v718 = vsel %vm654, %v614, %v686
      %v719 = vsel %vm655, %v619, %v687
      %v720 = vsel %vm656, %v622, %v688
      %v721 = vpack.c.bf16 %v690, %v689
      %v722 = vpack.c.bf16 %v692, %v691
      %v723 = vpack.c.bf16 %v694, %v693
      %v724 = vpack.c.bf16 %v696, %v695
      %v725 = vpack.c.bf16 %v698, %v697
      %v726 = vpack.c.bf16 %v700, %v699
      %v727 = vpack.c.bf16 %v702, %v701
      %v728 = vpack.c.bf16 %v704, %v703
      %v729 = vpack.c.bf16 %v706, %v705
      %v730 = vpack.c.bf16 %v708, %v707
      %v731 = vpack.c.bf16 %v710, %v709
      %v732 = vpack.c.bf16 %v712, %v711
      %v733 = vpack.c.bf16 %v714, %v713
      %v734 = vpack.c.bf16 %v716, %v715
      %v735 = vpack.c.bf16 %v718, %v717
      %v736 = vpack.c.bf16 %v720, %v719
      %v737 = vld [vmem:[%s3] sm:$0xf]
      %v738 = vld [vmem:[%s3 + $0x4] sm:$0xf]
      %v739 = vld [vmem:[%s3 + $0x8] sm:$0xf]
      %v740 = vld [vmem:[%s3 + $0xc] sm:$0xf]
      %v741 = vld [vmem:[%s3 + $0x10] sm:$0xf]
      %v742 = vld [vmem:[%s3 + $0x14] sm:$0xf]
      %v743 = vld [vmem:[%s3 + $0x18] sm:$0xf]
      %v744 = vld [vmem:[%s3 + $0x1c] sm:$0xf]
      %v745 = vld [vmem:[%s3 + $0x20] sm:$0xf]
      %v746 = vld [vmem:[%s3 + $0x24] sm:$0xf]
      %v747 = vld [vmem:[%s3 + $0x28] sm:$0xf]
      %v748 = vld [vmem:[%s3 + $0x2c] sm:$0xf]
      %v749 = vld [vmem:[%s3 + $0x30] sm:$0xf]
      %v750 = vld [vmem:[%s3 + $0x34] sm:$0xf]
      %v751 = vld [vmem:[%s3 + $0x38] sm:$0xf]
      %v752 = vld [vmem:[%s3 + $0x3c] sm:$0xf]
      %v753 = vld [vmem:[%s4] sm:$0x1]
      %v755 = vlaneseq
      %v756 = vshrl.u32 %v755, 7
      %v757 = vsub.s32 0, %v756
      %v758 = vrot.slane %v753, %v757
      %v776 = vunpack.c.l.b16 %v737
      %v777 = vunpack.c.l.b16 %v738
      %v778 = vunpack.c.l.b16 %v739
      %v779 = vunpack.c.l.b16 %v740
      %v780 = vunpack.c.l.b16 %v741
      %v781 = vunpack.c.l.b16 %v742
      %v782 = vunpack.c.l.b16 %v743
      %v783 = vunpack.c.l.b16 %v744
      %v784 = vunpack.c.l.b16 %v745
      %v785 = vunpack.c.l.b16 %v746
      %v786 = vunpack.c.l.b16 %v747
      %v787 = vunpack.c.l.b16 %v748
      %v788 = vunpack.c.l.b16 %v749
      %v789 = vunpack.c.l.b16 %v750
      %v790 = vunpack.c.l.b16 %v751
      %v791 = vunpack.c.l.b16 %v752
      %v792 = vpack.c.b16 %v777, %v776
      %v793 = vpack.c.b16 %v779, %v778
      %v794 = vpack.c.b16 %v781, %v780
      %v795 = vpack.c.b16 %v783, %v782
      %v796 = vpack.c.b16 %v785, %v784
      %v797 = vpack.c.b16 %v787, %v786
      %v798 = vpack.c.b16 %v789, %v788
      %v799 = vpack.c.b16 %v791, %v790
      %808 = vmatprep.subr.bf16.mxu0 0
      %809 = vmatpush1.bf16.msra.mxu0 %v799
      %810 = vmatprep.subr.bf16.mxu0 0
      %811 = vmatpush1.bf16.msra.mxu0 %v798
      %812 = vmatprep.subr.bf16.mxu0 0
      %813 = vmatpush1.bf16.msra.mxu0 %v797
      %814 = vmatprep.subr.bf16.mxu0 0
      %815 = vmatpush1.bf16.msra.mxu0 %v796
      %816 = vmatprep.subr.bf16.mxu0 0
      %817 = vmatpush1.bf16.msra.mxu0 %v795
      %818 = vmatprep.subr.bf16.mxu0 0
      %819 = vmatpush1.bf16.msra.mxu0 %v794
      %820 = vmatprep.subr.bf16.mxu0 0
      %821 = vmatpush1.bf16.msra.mxu0 %v793
      %822 = vmatprep.subr.bf16.mxu0 0
      %823 = vmatpush1.bf16.msra.mxu0 %v792
      %824 = vmatprep.subr.bf16.mxu0 0
      %825 = vmatpush2.bf16.msra.mxu0 0
      %826 = vmatprep.subr.bf16.mxu0 0
      %827 = vmatpush2.bf16.msra.mxu0 0
      %828 = vmatprep.subr.bf16.mxu0 0
      %829 = vmatpush2.bf16.msra.mxu0 0
      %830 = vmatprep.subr.bf16.mxu0 0
      %831 = vmatpush2.bf16.msra.mxu0 0
      %832 = vmatprep.subr.bf16.mxu0 0
      %833 = vmatpush2.bf16.msra.mxu0 0
      %834 = vmatprep.subr.bf16.mxu0 0
      %835 = vmatpush2.bf16.msra.mxu0 0
      %836 = vmatprep.subr.bf16.mxu0 0
      %837 = vmatpush2.bf16.msra.mxu0 0
      %838 = vmatprep.subr.bf16.mxu0 0
      %839 = vmatpush2.bf16.msra.mxu0 0
      %840 = vmatprep.mubr.bf16.mxu0 0
      %841 = vmatmul.mubr.bf16.gmra.mxu0 %v721
      %v842 = vpop.f32.mrf.mxu0
      %v843 = vadd.f32 %v758, %v842
      %v844 = vpop.f32.mrf.mxu0
      %v845 = vpop.f32.mrf.mxu0
      %v846 = vadd.f32 %v758, %v845
      %v847 = vpop.f32.mrf.mxu0
      %848 = vmatprep.mubr.bf16.mxu0 0
      %849 = vmatmul.mubr.bf16.gmra.mxu0 %v722
      %v850 = vpop.f32.mrf.mxu0
      %v851 = vadd.f32 %v758, %v850
      %v852 = vpop.f32.mrf.mxu0
      %v853 = vpop.f32.mrf.mxu0
      %v854 = vadd.f32 %v758, %v853
      %v855 = vpop.f32.mrf.mxu0
      %856 = vmatprep.mubr.bf16.mxu0 0
      %857 = vmatmul.mubr.bf16.gmra.mxu0 %v723
      %v858 = vpop.f32.mrf.mxu0
      %v859 = vadd.f32 %v758, %v858
      %v860 = vpop.f32.mrf.mxu0
      %v861 = vpop.f32.mrf.mxu0
      %v862 = vadd.f32 %v758, %v861
      %v863 = vpop.f32.mrf.mxu0
      %864 = vmatprep.mubr.bf16.mxu0 0
      %865 = vmatmul.mubr.bf16.gmra.mxu0 %v724
      %v866 = vpop.f32.mrf.mxu0
      %v867 = vadd.f32 %v758, %v866
      %v868 = vpop.f32.mrf.mxu0
      %v869 = vpop.f32.mrf.mxu0
      %v870 = vadd.f32 %v758, %v869
      %v871 = vpop.f32.mrf.mxu0
      %872 = vmatprep.mubr.bf16.mxu0 0
      %873 = vmatmul.mubr.bf16.gmra.mxu0 %v725
      %v874 = vpop.f32.mrf.mxu0
      %v875 = vadd.f32 %v758, %v874
      %v876 = vpop.f32.mrf.mxu0
      %v877 = vpop.f32.mrf.mxu0
      %v878 = vadd.f32 %v758, %v877
      %v879 = vpop.f32.mrf.mxu0
      %880 = vmatprep.mubr.bf16.mxu0 0
      %881 = vmatmul.mubr.bf16.gmra.mxu0 %v726
      %v882 = vpop.f32.mrf.mxu0
      %v883 = vadd.f32 %v758, %v882
      %v884 = vpop.f32.mrf.mxu0
      %v885 = vpop.f32.mrf.mxu0
      %v886 = vadd.f32 %v758, %v885
      %v887 = vpop.f32.mrf.mxu0
      %888 = vmatprep.mubr.bf16.mxu0 0
      %889 = vmatmul.mubr.bf16.gmra.mxu0 %v727
      %v890 = vpop.f32.mrf.mxu0
      %v891 = vadd.f32 %v758, %v890
      %v892 = vpop.f32.mrf.mxu0
      %v893 = vpop.f32.mrf.mxu0
      %v894 = vadd.f32 %v758, %v893
      %v895 = vpop.f32.mrf.mxu0
      %896 = vmatprep.mubr.bf16.mxu0 0
      %897 = vmatmul.mubr.bf16.gmra.mxu0 %v728
      %v898 = vpop.f32.mrf.mxu0
      %v899 = vadd.f32 %v758, %v898
      %v900 = vpop.f32.mrf.mxu0
      %v901 = vpop.f32.mrf.mxu0
      %v902 = vadd.f32 %v758, %v901
      %v903 = vpop.f32.mrf.mxu0
      %904 = vmatprep.mubr.bf16.mxu0 0
      %905 = vmatmul.mubr.bf16.gmra.mxu0 %v729
      %v906 = vpop.f32.mrf.mxu0
      %v907 = vadd.f32 %v758, %v906
      %v908 = vpop.f32.mrf.mxu0
      %v909 = vpop.f32.mrf.mxu0
      %v910 = vadd.f32 %v758, %v909
      %v911 = vpop.f32.mrf.mxu0
      %912 = vmatprep.mubr.bf16.mxu0 0
      %913 = vmatmul.mubr.bf16.gmra.mxu0 %v730
      %v914 = vpop.f32.mrf.mxu0
      %v915 = vadd.f32 %v758, %v914
      %v916 = vpop.f32.mrf.mxu0
      %v917 = vpop.f32.mrf.mxu0
      %v918 = vadd.f32 %v758, %v917
      %v919 = vpop.f32.mrf.mxu0
      %920 = vmatprep.mubr.bf16.mxu0 0
      %921 = vmatmul.mubr.bf16.gmra.mxu0 %v731
      %v922 = vpop.f32.mrf.mxu0
      %v923 = vadd.f32 %v758, %v922
      %v924 = vpop.f32.mrf.mxu0
      %v925 = vpop.f32.mrf.mxu0
      %v926 = vadd.f32 %v758, %v925
      %v927 = vpop.f32.mrf.mxu0
      %928 = vmatprep.mubr.bf16.mxu0 0
      %929 = vmatmul.mubr.bf16.gmra.mxu0 %v732
      %v930 = vpop.f32.mrf.mxu0
      %v931 = vadd.f32 %v758, %v930
      %v932 = vpop.f32.mrf.mxu0
      %v933 = vpop.f32.mrf.mxu0
      %v934 = vadd.f32 %v758, %v933
      %v935 = vpop.f32.mrf.mxu0
      %936 = vmatprep.mubr.bf16.mxu0 0
      %937 = vmatmul.mubr.bf16.gmra.mxu0 %v733
      %v938 = vpop.f32.mrf.mxu0
      %v939 = vadd.f32 %v758, %v938
      %v940 = vpop.f32.mrf.mxu0
      %v941 = vpop.f32.mrf.mxu0
      %v942 = vadd.f32 %v758, %v941
      %v943 = vpop.f32.mrf.mxu0
      %944 = vmatprep.mubr.bf16.mxu0 0
      %945 = vmatmul.mubr.bf16.gmra.mxu0 %v734
      %v946 = vpop.f32.mrf.mxu0
      %v947 = vadd.f32 %v758, %v946
      %v948 = vpop.f32.mrf.mxu0
      %v949 = vpop.f32.mrf.mxu0
      %v950 = vadd.f32 %v758, %v949
      %v951 = vpop.f32.mrf.mxu0
      %952 = vmatprep.mubr.bf16.mxu0 0
      %953 = vmatmul.mubr.bf16.gmra.mxu0 %v735
      %v954 = vpop.f32.mrf.mxu0
      %v955 = vadd.f32 %v758, %v954
      %v956 = vpop.f32.mrf.mxu0
      %v957 = vpop.f32.mrf.mxu0
      %v958 = vadd.f32 %v758, %v957
      %v959 = vpop.f32.mrf.mxu0
      %960 = vmatprep.mubr.bf16.mxu0 0
      %961 = vmatmul.mubr.bf16.gmra.mxu0 %v736
      %v962 = vpop.f32.mrf.mxu0
      %v963 = vadd.f32 %v758, %v962
      %v964 = vpop.f32.mrf.mxu0
      %v965 = vpop.f32.mrf.mxu0
      %v966 = vadd.f32 %v758, %v965
      %v967 = vpop.f32.mrf.mxu0
      %968 = vdwg.mxu0
      %v969 = vpack.c.bf16 %v846, %v843
      %v970 = vpack.c.bf16 %v854, %v851
      %v971 = vpack.c.bf16 %v862, %v859
      %v972 = vpack.c.bf16 %v870, %v867
      %v973 = vpack.c.bf16 %v878, %v875
      %v974 = vpack.c.bf16 %v886, %v883
      %v975 = vpack.c.bf16 %v894, %v891
      %v976 = vpack.c.bf16 %v902, %v899
      %v977 = vpack.c.bf16 %v910, %v907
      %v978 = vpack.c.bf16 %v918, %v915
      %v979 = vpack.c.bf16 %v926, %v923
      %v980 = vpack.c.bf16 %v934, %v931
      %v981 = vpack.c.bf16 %v942, %v939
      %v982 = vpack.c.bf16 %v950, %v947
      %v983 = vpack.c.bf16 %v958, %v955
      %v984 = vpack.c.bf16 %v966, %v963
      %v1001 = vunpack.c.l.b16 %v969
      %v1002 = vunpack.c.h.b16 %v969
      %v1003 = vunpack.c.l.b16 %v970
      %v1004 = vunpack.c.h.b16 %v970
      %v1005 = vunpack.c.l.b16 %v971
      %v1006 = vunpack.c.h.b16 %v971
      %v1007 = vunpack.c.l.b16 %v972
      %v1008 = vunpack.c.h.b16 %v972
      %v1009 = vunpack.c.l.b16 %v973
      %v1010 = vunpack.c.h.b16 %v973
      %v1011 = vunpack.c.l.b16 %v974
      %v1012 = vunpack.c.h.b16 %v974
      %v1013 = vunpack.c.l.b16 %v975
      %v1014 = vunpack.c.h.b16 %v975
      %v1015 = vunpack.c.l.b16 %v976
      %v1016 = vunpack.c.h.b16 %v976
      %v1017 = vunpack.c.l.b16 %v977
      %v1018 = vunpack.c.h.b16 %v977
      %v1019 = vunpack.c.l.b16 %v978
      %v1020 = vunpack.c.h.b16 %v978
      %v1021 = vunpack.c.l.b16 %v979
      %v1022 = vunpack.c.h.b16 %v979
      %v1023 = vunpack.c.l.b16 %v980
      %v1024 = vunpack.c.h.b16 %v980
      %v1025 = vunpack.c.l.b16 %v981
      %v1026 = vunpack.c.h.b16 %v981
      %v1027 = vunpack.c.l.b16 %v982
      %v1028 = vunpack.c.h.b16 %v982
      %v1029 = vunpack.c.l.b16 %v983
      %v1030 = vunpack.c.h.b16 %v983
      %v1031 = vunpack.c.l.b16 %v984
      %v1032 = vunpack.c.h.b16 %v984
      %v1033 = vpack.c.b16 %v1001, %v1001
      %v1034 = vpack.c.b16 %v1002, %v1002
      %v1035 = vpack.c.b16 %v1003, %v1003
      %v1036 = vpack.c.b16 %v1004, %v1004
      %v1037 = vpack.c.b16 %v1005, %v1005
      %v1038 = vpack.c.b16 %v1006, %v1006
      %v1039 = vpack.c.b16 %v1007, %v1007
      %v1040 = vpack.c.b16 %v1008, %v1008
      %v1041 = vpack.c.b16 %v1009, %v1009
      %v1042 = vpack.c.b16 %v1010, %v1010
      %v1043 = vpack.c.b16 %v1011, %v1011
      %v1044 = vpack.c.b16 %v1012, %v1012
      %v1045 = vpack.c.b16 %v1013, %v1013
      %v1046 = vpack.c.b16 %v1014, %v1014
      %v1047 = vpack.c.b16 %v1015, %v1015
      %v1048 = vpack.c.b16 %v1016, %v1016
      %v1049 = vpack.c.b16 %v1017, %v1017
      %v1050 = vpack.c.b16 %v1018, %v1018
      %v1051 = vpack.c.b16 %v1019, %v1019
      %v1052 = vpack.c.b16 %v1020, %v1020
      %v1053 = vpack.c.b16 %v1021, %v1021
      %v1054 = vpack.c.b16 %v1022, %v1022
      %v1055 = vpack.c.b16 %v1023, %v1023
      %v1056 = vpack.c.b16 %v1024, %v1024
      %v1057 = vpack.c.b16 %v1025, %v1025
      %v1058 = vpack.c.b16 %v1026, %v1026
      %v1059 = vpack.c.b16 %v1027, %v1027
      %v1060 = vpack.c.b16 %v1028, %v1028
      %v1061 = vpack.c.b16 %v1029, %v1029
      %v1062 = vpack.c.b16 %v1030, %v1030
      %v1063 = vpack.c.b16 %v1031, %v1031
      %v1064 = vpack.c.b16 %v1032, %v1032
      %1097 = vst [vmem:[%s262] sm:$0xf] %v1033
      %1098 = vst [vmem:[%s262 + $0x4] sm:$0xf] %v1034
      %1099 = vst [vmem:[%s262 + $0x8] sm:$0xf] %v1035
      %1100 = vst [vmem:[%s262 + $0xc] sm:$0xf] %v1036
      %1101 = vst [vmem:[%s262 + $0x10] sm:$0xf] %v1037
      %1102 = vst [vmem:[%s262 + $0x14] sm:$0xf] %v1038
      %1103 = vst [vmem:[%s262 + $0x18] sm:$0xf] %v1039
      %1104 = vst [vmem:[%s262 + $0x1c] sm:$0xf] %v1040
      %1105 = vst [vmem:[%s262 + $0x20] sm:$0xf] %v1041
      %1106 = vst [vmem:[%s262 + $0x24] sm:$0xf] %v1042
      %1107 = vst [vmem:[%s262 + $0x28] sm:$0xf] %v1043
      %1108 = vst [vmem:[%s262 + $0x2c] sm:$0xf] %v1044
      %1109 = vst [vmem:[%s262 + $0x30] sm:$0xf] %v1045
      %1110 = vst [vmem:[%s262 + $0x34] sm:$0xf] %v1046
      %1111 = vst [vmem:[%s262 + $0x38] sm:$0xf] %v1047
      %1112 = vst [vmem:[%s262 + $0x3c] sm:$0xf] %v1048
      %1113 = vst [vmem:[%s262 + $0x40] sm:$0xf] %v1049
      %1114 = vst [vmem:[%s262 + $0x44] sm:$0xf] %v1050
      %1115 = vst [vmem:[%s262 + $0x48] sm:$0xf] %v1051
      %1116 = vst [vmem:[%s262 + $0x4c] sm:$0xf] %v1052
      %1117 = vst [vmem:[%s262 + $0x50] sm:$0xf] %v1053
      %1118 = vst [vmem:[%s262 + $0x54] sm:$0xf] %v1054
      %1119 = vst [vmem:[%s262 + $0x58] sm:$0xf] %v1055
      %1120 = vst [vmem:[%s262 + $0x5c] sm:$0xf] %v1056
      %1121 = vst [vmem:[%s262 + $0x60] sm:$0xf] %v1057
      %1122 = vst [vmem:[%s262 + $0x64] sm:$0xf] %v1058
      %1123 = vst [vmem:[%s262 + $0x68] sm:$0xf] %v1059
      %1124 = vst [vmem:[%s262 + $0x6c] sm:$0xf] %v1060
      %1125 = vst [vmem:[%s262 + $0x70] sm:$0xf] %v1061
      %1126 = vst [vmem:[%s262 + $0x74] sm:$0xf] %v1062
      %1127 = vst [vmem:[%s262 + $0x78] sm:$0xf] %v1063
      %1128 = vst [vmem:[%s262 + $0x7c] sm:$0xf] %v1064
      %s1129 = smul.u32 32, %s21
      %p1130 = scmp.lt.s32.totalorder %s20, 1
      %s1131 = scalar_select %p1130, %s20, 1
      %p1132 = scmp.lt.s32.totalorder %s1129, 31
      %s1133 = scalar_select %p1132, %s1129, 31
      %s1134 = smul.addr %s1131, 32
      %s1135 = sadd.s32 %s1133, %s1134
      %s1136 = smul.addr %s1135, 4
      %s1137 = scalar_lea.vmem %s5, %s1136
      // Predicated region
      $region41: #{scale_prediction.1} parent=39 // pred_check
        %p1138 = pneg %p160
      $region42: #{scale_prediction.1} parent=39 // pred_check_branch
        %1140 = sbr.rel (%p1138) target = $region44
      $region43: #{scale_prediction.1} parent=39 // pred_region
        %s1141 = smul.u32 32, %s21
      $region44: #{scale_prediction.1} parent=39 // pred_fallthru
        _
    $region40: #{scale_prediction.1} parent=5 // pred_fallthru
      _
    %p1142 = scmp.le.s32.totalorder 2, %s11
    // Predicated region
    $region45: #{scale_prediction.1} parent=5 // pred_check
      %p1143 = pneg %p1142
    $region46: #{scale_prediction.1} parent=5 // pred_check_branch
      %1145 = sbr.rel (%p1143) target = $region48
    $region47: #{scale_prediction.1} parent=5 // pred_region
      %s1146 = ssub.s32 %s11, 2
      // Predicated region
      $region49: #{scale_prediction.1} parent=47 // pred_check
        %p1147 = pneg %p166
      $region50: #{scale_prediction.1} parent=47 // pred_check_branch
        %1149 = sbr.rel (%p1147) target = $region52
      $region51: #{scale_prediction.1} parent=47 // pred_region
        %s1150 = smul.u32 32, %s23
        %p1151 = scmp.lt.s32.totalorder %s22, 1
        %s1152 = scalar_select %p1151, %s22, 1
        %p1153 = scmp.lt.s32.totalorder %s1150, 31
        %s1154 = scalar_select %p1153, %s1150, 31
        %s1155 = smul.addr %s1152, 32
        %s1156 = sadd.s32 %s1154, %s1155
        %s1157 = smul.addr %s1156, 4
        %s1158 = scalar_lea.vmem %s5, %s1157
      $region52: #{scale_prediction.1} parent=47 // pred_fallthru
        _
    $region48: #{scale_prediction.1} parent=5 // pred_fallthru
      _
  $region6: #{scale_prediction.1} parent=0 // loop_footer
    %s15 = sadd.s32 1, %s11
  $region7: #{scale_prediction.1} parent=0 // loop_footer_branch
    %10 = sbr.rel target = $region3
  $region8: #{scale_prediction.1} parent=0 // loop_exit
    _

</llo_original>
